<compile_context>
chip_gen: v5e
topology: v5e:2x2
jax: 0.10.0
libtpu: 0.0.40
codegen_flags: <defaults>
</compile_context>

<pallas_src>
import math
import functools

import jax
import jax.numpy as jnp
from jax.experimental import pallas as pl
from jax.experimental.pallas import tpu as pltpu

# TODO(synk): pretrained ViT (google/vit-base-patch16-224) image embedding has no
# Pallas equivalent; the kernel starts from the (batch, seq_len, d_model) embeddings.


def _scp_kernel(x_ref, aux_ref, wt_ref, out_ref, pred_ref, *,
                seq_len, d_model, epsilon):
    # x_ref:   (B, S, D)  float32 pre-scale embeddings
    # aux_ref: (S+3, D)   rows [0:S]=pos_encoding, S=alpha, S+1=beta, S+2=fc bias
    # wt_ref:  (D, D)     Linear weight already transposed to (in, out) layout
    S = seq_len
    pos   = aux_ref[0:S, :]            # (S, D)   broadcasts over batch
    alpha = aux_ref[S:S + 1, :]        # (1, D)
    beta  = aux_ref[S + 1:S + 2, :]    # (1, D)
    fc_b  = aux_ref[S + 2:S + 3, :]    # (1, D)

    # InputEmbeddings scaling + PositionalEncoding
    scale = jnp.float32(math.sqrt(d_model))
    x = x_ref[...] * scale + pos                                       # (B, S, D)

    # LayerNormalization with torch semantics: unbiased std (ddof=1), eps added to std.
    mean = jnp.mean(x, axis=-1, keepdims=True)                         # (B, S, 1)
    diff = x - mean
    var_u = jnp.sum(diff * diff, axis=-1, keepdims=True) * jnp.float32(1.0 / (d_model - 1))
    std = jnp.sqrt(var_u)                                              # (B, S, 1)
    inv = 1.0 / (std + jnp.float32(epsilon))                           # exact (full precision)
    y = (diff * inv) * alpha + beta                                    # (B, S, D)
    out_ref[...] = y

    # PredictionLayer, batched over B: last frame -> Linear -> ReLU.
    # wt is (in, out): pred[b, o] = sum_i last[b, i] * wt[i, o]  (natural MXU (K, N) push).
    last = y[:, -1, :]                                                 # (B, D)
    pred = jnp.dot(last, wt_ref[...], preferred_element_type=jnp.float32)  # (B, D)
    # B=2 -> sub-vreg masked store; fine at this size (pad B to a multiple of 8 if it grows).
    pred_ref[...] = jnp.maximum(pred + fc_b, 0.0)


def _positional_encoding(seq_len, d_model, temperature):
    """PositionalEncoding.forward() — interleaved sin/cos via stack+reshape (no scatters)."""
    pos = jnp.arange(seq_len, dtype=jnp.float32)[:, None]              # (S, 1)
    i = jnp.arange(d_model // 2, dtype=jnp.float32)[None, :]           # (1, D/2)
    angle_rates = 1.0 / (temperature ** (2.0 * i / d_model))           # (1, D/2)
    angles = pos * angle_rates                                         # (S, D/2)
    # columns 0::2 = sin, 1::2 = cos  ->  stack on last axis and flatten
    return jnp.stack([jnp.sin(angles), jnp.cos(angles)], axis=-1).reshape(seq_len, d_model)


def scp_forward(src, alpha, beta, fc_w, fc_b, *, temperature=10000.0, epsilon=1e-6):
    """src: (B, S, D) float32 embeddings (pre-scale). Returns (pred, enc_out, loss=None)."""
    B, S, D = src.shape
    assert D % 2 == 0, "positional encoding assumes even d_model"

    pos_enc = _positional_encoding(S, D, temperature)

    # One fat auxiliary operand instead of four tiny ones: single DMA descriptor.
    aux = jnp.concatenate(
        [pos_enc, alpha.reshape(1, D), beta.reshape(1, D), fc_b.reshape(1, D)], axis=0)

    # Pre-transpose the Linear weight to (in, out) layout once (XLA-side, ~free)
    # so the kernel never needs an in-kernel XLU transpose of the 128x128 weight.
    wt = fc_w.T

    kernel = functools.partial(_scp_kernel, seq_len=S, d_model=D, epsilon=epsilon)
    vmem = pl.BlockSpec(memory_space=pltpu.MemorySpace.VMEM)           # whole array in VMEM

    enc_out, pred = pl.pallas_call(
        kernel,
        out_shape=(
            jax.ShapeDtypeStruct((B, S, D), jnp.float32),              # encoder output
            jax.ShapeDtypeStruct((B, D), jnp.float32),                 # prediction
        ),
        in_specs=[vmem, vmem, vmem],
        out_specs=(vmem, vmem),
    )(src, aux, wt)

    # Encoder has zero layers -> loss is None (matches PyTorch reference with layers=[]).
    return pred, enc_out, None


if __name__ == "__main__":
    B, S, D = 2, 8, 128   # batch, seq_len, d_model

    key = jax.random.PRNGKey(0)
    k_src, k_w, k_b = jax.random.split(key, 3)

    # deterministic synthetic "ViT embeddings"
    src = jax.random.normal(k_src, (B, S, D), dtype=jnp.float32)

    # LayerNormalization params (as initialized in the module)
    alpha = jnp.ones((D,), jnp.float32)
    beta = jnp.zeros((D,), jnp.float32)

    # PredictionLayer Linear(d_model, d_model): deterministic uniform init, (out, in) layout
    bound = 1.0 / math.sqrt(D)
    fc_w = jax.random.uniform(k_w, (D, D), jnp.float32, -bound, bound)
    fc_b = jax.random.uniform(k_b, (D,), jnp.float32, -bound, bound)

    # jit the whole forward so wrapper prep fuses and per-call dispatch is amortized.
    fwd = jax.jit(scp_forward)
    pred, enc_out, loss = fwd(src, alpha, beta, fc_w, fc_b)
    jax.block_until_ready((pred, enc_out))

    # plain-JAX reference (torch semantics: unbiased std, eps added to std)
    pe = _positional_encoding(S, D, 10000.0)
    xr = src * math.sqrt(D) + pe[None]
    mean = xr.mean(-1, keepdims=True)
    std = jnp.sqrt(((xr - mean) ** 2).sum(-1, keepdims=True) / (D - 1))
    yr = alpha * (xr - mean) / (std + 1e-6) + beta
    pr = jnp.maximum(yr[:, -1, :] @ fc_w.T + fc_b, 0.0)

    assert loss is None
    assert jnp.allclose(enc_out, yr, atol=1e-4, rtol=1e-4), float(jnp.abs(enc_out - yr).max())
    assert jnp.allclose(pred, pr, atol=1e-4, rtol=1e-4), float(jnp.abs(pred - pr).max())

    print("KERNEL_OK")
</pallas_src>

<mosaic_0001>
module attributes {stable_mosaic.version = 11 : i64} {
  func.func @_scp_kernel(%arg0: memref<2x8x128xf32, #tpu.memory_space<vmem>>, %arg1: memref<11x128xf32, #tpu.memory_space<vmem>>, %arg2: memref<128x128xf32, #tpu.memory_space<vmem>>, %arg3: memref<2x8x128xf32, #tpu.memory_space<vmem>>, %arg4: memref<2x128xf32, #tpu.memory_space<vmem>>) attributes {dimension_semantics = [], scalar_prefetch = 0 : i64, scratch_operands = 0 : i64, tpu.core_type = #tpu.core_type<tc>} {
    %c0 = arith.constant 0 : index
    %c0_0 = arith.constant 0 : index
    %0 = vector.load %arg1[%c0, %c0_0] : memref<11x128xf32, #tpu.memory_space<vmem>>, vector<8x128xf32>
    %c8 = arith.constant 8 : index
    %c0_1 = arith.constant 0 : index
    %1 = vector.load %arg1[%c8, %c0_1] : memref<11x128xf32, #tpu.memory_space<vmem>>, vector<1x128xf32>
    %c9 = arith.constant 9 : index
    %c0_2 = arith.constant 0 : index
    %2 = vector.load %arg1[%c9, %c0_2] : memref<11x128xf32, #tpu.memory_space<vmem>>, vector<1x128xf32>
    %c10 = arith.constant 10 : index
    %c0_3 = arith.constant 0 : index
    %3 = vector.load %arg1[%c10, %c0_3] : memref<11x128xf32, #tpu.memory_space<vmem>>, vector<1x128xf32>
    %c0_4 = arith.constant 0 : index
    %c0_5 = arith.constant 0 : index
    %c0_6 = arith.constant 0 : index
    %4 = vector.load %arg0[%c0_4, %c0_5, %c0_6] : memref<2x8x128xf32, #tpu.memory_space<vmem>>, vector<2x8x128xf32>
    %cst = arith.constant 11.3137083 : f32
    %5 = vector.broadcast %cst : f32 to vector<2x8x128xf32>
    %6 = arith.mulf %4, %5 : vector<2x8x128xf32>
    %7 = vector.shape_cast %0 : vector<8x128xf32> to vector<1x8x128xf32>
    %8 = vector.broadcast %7 : vector<1x8x128xf32> to vector<2x8x128xf32>
    %9 = arith.addf %6, %8 : vector<2x8x128xf32>
    %cst_7 = arith.constant dense<0.000000e+00> : vector<2x8xf32>
    %10 = vector.multi_reduction <add>, %9, %cst_7 [2] : vector<2x8x128xf32> to vector<2x8xf32>
    %11 = vector.shape_cast %10 : vector<2x8xf32> to vector<2x8x1xf32>
    %cst_8 = arith.constant 1.280000e+02 : f32
    %12 = vector.broadcast %cst_8 : f32 to vector<2x8x1xf32>
    %13 = arith.divf %11, %12 : vector<2x8x1xf32>
    %14 = vector.broadcast %13 : vector<2x8x1xf32> to vector<2x8x128xf32>
    %15 = arith.subf %9, %14 : vector<2x8x128xf32>
    %16 = arith.mulf %15, %15 : vector<2x8x128xf32>
    %cst_9 = arith.constant dense<0.000000e+00> : vector<2x8xf32>
    %17 = vector.multi_reduction <add>, %16, %cst_9 [2] : vector<2x8x128xf32> to vector<2x8xf32>
    %18 = vector.shape_cast %17 : vector<2x8xf32> to vector<2x8x1xf32>
    %cst_10 = arith.constant 0.00787401571 : f32
    %19 = vector.broadcast %cst_10 : f32 to vector<2x8x1xf32>
    %20 = arith.mulf %18, %19 : vector<2x8x1xf32>
    %21 = math.sqrt %20 : vector<2x8x1xf32>
    %cst_11 = arith.constant 9.99999997E-7 : f32
    %22 = vector.broadcast %cst_11 : f32 to vector<2x8x1xf32>
    %23 = arith.addf %21, %22 : vector<2x8x1xf32>
    %cst_12 = arith.constant 1.000000e+00 : f32
    %24 = vector.broadcast %cst_12 : f32 to vector<2x8x1xf32>
    %25 = arith.divf %24, %23 : vector<2x8x1xf32>
    %26 = vector.broadcast %25 : vector<2x8x1xf32> to vector<2x8x128xf32>
    %27 = arith.mulf %15, %26 : vector<2x8x128xf32>
    %28 = vector.shape_cast %1 : vector<1x128xf32> to vector<1x1x128xf32>
    %29 = vector.broadcast %28 : vector<1x1x128xf32> to vector<2x8x128xf32>
    %30 = arith.mulf %27, %29 : vector<2x8x128xf32>
    %31 = vector.shape_cast %2 : vector<1x128xf32> to vector<1x1x128xf32>
    %32 = vector.broadcast %31 : vector<1x1x128xf32> to vector<2x8x128xf32>
    %33 = arith.addf %30, %32 : vector<2x8x128xf32>
    %c0_13 = arith.constant 0 : index
    %c0_14 = arith.constant 0 : index
    %c0_15 = arith.constant 0 : index
    %34 = vector.load %arg3[%c0_13, %c0_14, %c0_15] : memref<2x8x128xf32, #tpu.memory_space<vmem>>, vector<2x8x128xf32>
    tpu.vector_store %arg3[%c0_13, %c0_14, %c0_15], %33 {strides = array<i32>} : memref<2x8x128xf32, #tpu.memory_space<vmem>>, vector<2x8x128xf32>,
    %35 = vector.extract_strided_slice %33 {offsets = [0, 7, 0], sizes = [2, 1, 128], strides = [1, 1, 1]} : vector<2x8x128xf32> to vector<2x1x128xf32>
    %36 = vector.shape_cast %35 : vector<2x1x128xf32> to vector<2x128xf32>
    %c0_16 = arith.constant 0 : index
    %c0_17 = arith.constant 0 : index
    %37 = vector.load %arg2[%c0_16, %c0_17] : memref<128x128xf32, #tpu.memory_space<vmem>>, vector<128x128xf32>
    %cst_18 = arith.constant dense<0.000000e+00> : vector<2x128xf32>
    %38 = tpu.matmul %36, %37, %cst_18 {dimension_numbers = #tpu.dot_dimension_numbers<[1], [0], [0], [1], [0, 0, 1, 1], [], []>} : vector<2x128xf32>, vector<128x128xf32>, vector<2x128xf32> -> vector<2x128xf32>
    %39 = vector.broadcast %3 : vector<1x128xf32> to vector<2x128xf32>
    %40 = arith.addf %38, %39 : vector<2x128xf32>
    %cst_19 = arith.constant 0.000000e+00 : f32
    %41 = vector.broadcast %cst_19 : f32 to vector<2x128xf32>
    %42 = arith.maximumf %40, %41 : vector<2x128xf32>
    %c0_20 = arith.constant 0 : index
    %c0_21 = arith.constant 0 : index
    %43 = vector.load %arg4[%c0_20, %c0_21] : memref<2x128xf32, #tpu.memory_space<vmem>>, vector<2x128xf32>
    tpu.vector_store %arg4[%c0_20, %c0_21], %42 {strides = array<i32>} : memref<2x128xf32, #tpu.memory_space<vmem>>, vector<2x128xf32>,
    return
  }
}

</mosaic_0001>

<llo_original>
// kernel: scp_forward.1
$region0: #{scp_forward.1}
  #allocation0 [shape = 'u32[]', space=smem, size = 0x4, offset = 0x4, fixed_abs, tag = 'smem constant byte address 0x4 - core index']
  #allocation1 [shape = 'u32[72,128]{1,0:T(1,128)}', space=vmem, size = 0x9000, scoped, tag = 'internal scratch']
  %s0 = inlined_call_operand.vmem [shape: f32[2,8,128], index: 0, kind: input, shape index: {}]
  %s1 = inlined_call_operand.vmem [shape: f32[11,128], index: 1, kind: input, shape index: {}]
  %s2 = inlined_call_operand.vmem [shape: f32[128,128], index: 2, kind: input, shape index: {}]
  %s3 = inlined_call_operand.hbm [shape: f32[2,8,128], index: 3, kind: output, shape index: {0}]
  %s4 = inlined_call_operand.hbm [shape: f32[2,128], index: 4, kind: output, shape index: {1}]
  %5 = xla_tuple %s3, %s4
  %s6 = sld [smem:[#allocation0]]
  $region30: #{scp_forward.1} parent=0
    _
  %s8 = ssub.s32 1, %s6
  %s9 = scalar_select 0, %s8, %s6
  $region1: #{scp_forward.1} parent=0
    #allocation2 [shape = 'u8[8192]{0}', space=vmem, size = 0x2000, scoped, tag = 'output window, operand 0, single buffered']
    #allocation3 [shape = 's32[1]{0}', space=sflag, size = 0x4, scoped, tag = 'scoped memory for scp_forward.1']
    #allocation4 [shape = 'u8[1024]{0}', space=vmem, size = 0x400, scoped, tag = 'output window, operand 1, single buffered']
    #allocation5 [shape = 's32[1]{0}', space=sflag, size = 0x4, scoped, tag = 'scoped memory for scp_forward.1']
    %10 = vsyncpa [#allocation3], 0
    %11 = vsyncpa [#allocation5], 0
    // Predicated region
    $region2: #{scp_forward.1} parent=1 // pred_check
      _
    $region3: #{scp_forward.1} parent=1 // pred_check_branch
      %13 = sbr.rel (0) target = $region5
    $region4: #{scp_forward.1} parent=1 // pred_region
      _
    $region5: #{scp_forward.1} parent=1 // pred_fallthru
      _
    // Predicated region
    $region6: #{scp_forward.1} parent=1 // pred_check
      _
    $region7: #{scp_forward.1} parent=1 // pred_check_branch
      %15 = sbr.rel (0) target = $region9
    $region8: #{scp_forward.1} parent=1 // pred_region
      _
    $region9: #{scp_forward.1} parent=1 // pred_fallthru
      _
    // Predicated region
    $region10: #{scp_forward.1} parent=1 // pred_check
      _
    $region11: #{scp_forward.1} parent=1 // pred_check_branch
      %17 = sbr.rel (0) target = $region13
    $region12: #{scp_forward.1} parent=1 // pred_region
      _
    $region13: #{scp_forward.1} parent=1 // pred_fallthru
      _
    %v18 = vld [vmem:[%s1] sm:$0xff]
    %v19 = vld [vmem:[%s1 + $0x8] sm:$0x1]
    %v20 = vld [vmem:[%s1 + $0x9] sm:$0x1]
    %v21 = vld [vmem:[%s1 + $0xa] sm:$0x1]
    %v22 = vld [vmem:[%s0] sm:$0xff]
    %v23 = vld [vmem:[%s0 + $0x8] sm:$0xff]
    %v24 = vmul.f32 %v22, 11.313708
    %v25 = vmul.f32 %v23, 11.313708
    %v26 = vadd.f32 %v24, %v18
    %v27 = vadd.f32 %v25, %v18
    %28 = vadd.xlane.f32.xlu0 %v26
    %v29 = vpop.xlane.xlu0 %28
    %30 = vadd.xlane.f32.xlu0 %v27
    %v31 = vpop.xlane.xlu0 %30
    %v32 = vrcp.pop 128.0
    %v33 = vmul.f32 128.0, %v32
    %v34 = vsub.f32 1.0, %v33
    %v35 = vmul.f32 %v32, %v34
    %v36 = vadd.f32 %v32, %v35
    %vm37 = vweird.f32 %v32
    %v38 = vsel %vm37, %v32, %v36
    %v39 = vmul.f32 %v29, %v38
    %v40 = vmul.f32 %v31, %v38
    %v41 = vsub.f32 %v26, %v39
    %v42 = vsub.f32 %v27, %v40
    %v43 = vmul.f32 %v41, %v41
    %v44 = vmul.f32 %v42, %v42
    %45 = vadd.xlane.f32.xlu0 %v43
    %v46 = vpop.xlane.xlu0 %45
    %47 = vadd.xlane.f32.xlu0 %v44
    %v48 = vpop.xlane.xlu0 %47
    %v49 = vmul.f32 %v46, 0.007874016
    %v50 = vmul.f32 %v48, 0.007874016
    %v51 = vrsqrt.pop %v49
    %v52 = vmul.f32 %v51, %v49
    %v53 = vmul.f32 %v52, %v51
    %v54 = vmul.f32 0.5, %v53
    %v55 = vsub.f32 1.5, %v54
    %v56 = vmul.f32 %v51, %v55
    %v57 = vmul.f32 %v49, %v56
    %vm58 = vcmp.eq.f32.partialorder %v49, inf
    %v59 = vsel %vm58, %v49, %v57
    %vm60 = vcmp.eq.f32.partialorder %v49, 0.0
    %v61 = vand.u32 %v49, 2147483648
    %v62 = vsel %vm60, %v61, %v59
    %v63 = vrsqrt.pop %v50
    %v64 = vmul.f32 %v63, %v50
    %v65 = vmul.f32 %v64, %v63
    %v66 = vmul.f32 0.5, %v65
    %v67 = vsub.f32 1.5, %v66
    %v68 = vmul.f32 %v63, %v67
    %v69 = vmul.f32 %v50, %v68
    %vm70 = vcmp.eq.f32.partialorder %v50, inf
    %v71 = vsel %vm70, %v50, %v69
    %vm72 = vcmp.eq.f32.partialorder %v50, 0.0
    %v73 = vand.u32 %v50, 2147483648
    %v74 = vsel %vm72, %v73, %v71
    %v75 = vadd.f32 %v62, 1e-06
    %v76 = vadd.f32 %v74, 1e-06
    %v77 = vrcp.pop %v75
    %v78 = vmul.f32 %v75, %v77
    %v79 = vsub.f32 1.0, %v78
    %v80 = vmul.f32 %v77, %v79
    %v81 = vadd.f32 %v77, %v80
    %vm82 = vweird.f32 %v75
    %vm83 = vweird.f32 %v77
    %vm84 = vmor %vm82, %vm83
    %v85 = vsel %vm84, %v77, %v81
    %v86 = vand.u32 2147483647, %v75
    %vm87 = vcmp.eq.f32.partialorder %v86, 8.507059e+37
    %v88 = vand.u32 %v75, 2147483648
    %v89 = vor.u32 1.1754944e-38, %v88
    %v90 = vsel %vm87, %v89, %v85
    %v91 = vmul.f32 1.0, %v90
    %v92 = vrcp.pop %v76
    %v93 = vmul.f32 %v76, %v92
    %v94 = vsub.f32 1.0, %v93
    %v95 = vmul.f32 %v92, %v94
    %v96 = vadd.f32 %v92, %v95
    %vm97 = vweird.f32 %v76
    %vm98 = vweird.f32 %v92
    %vm99 = vmor %vm97, %vm98
    %v100 = vsel %vm99, %v92, %v96
    %v101 = vand.u32 2147483647, %v76
    %vm102 = vcmp.eq.f32.partialorder %v101, 8.507059e+37
    %v103 = vand.u32 %v76, 2147483648
    %v104 = vor.u32 1.1754944e-38, %v103
    %v105 = vsel %vm102, %v104, %v100
    %v106 = vmul.f32 1.0, %v105
    %v107 = vmul.f32 %v41, %v91
    %v108 = vmul.f32 %v42, %v106
    %v109 = vperm.slane %v19, 0
    %v110 = vmul.f32 %v107, %v109
    %v111 = vmul.f32 %v108, %v109
    %v112 = vperm.slane %v20, 0
    %v113 = vadd.f32 %v110, %v112
    %v114 = vadd.f32 %v111, %v112
    %115 = vst [vmem:[#allocation2] sm:$0xff] %v113
    %116 = vst [vmem:[#allocation2 + $0x8] sm:$0xff] %v114
    %v117 = vld [vmem:[%s2] sm:$0xff]
    %v118 = vld [vmem:[%s2 + $0x8] sm:$0xff]
    %v119 = vld [vmem:[%s2 + $0x10] sm:$0xff]
    %v120 = vld [vmem:[%s2 + $0x18] sm:$0xff]
    %v121 = vld [vmem:[%s2 + $0x20] sm:$0xff]
    %v122 = vld [vmem:[%s2 + $0x28] sm:$0xff]
    %v123 = vld [vmem:[%s2 + $0x30] sm:$0xff]
    %v124 = vld [vmem:[%s2 + $0x38] sm:$0xff]
    %v125 = vld [vmem:[%s2 + $0x40] sm:$0xff]
    %v126 = vld [vmem:[%s2 + $0x48] sm:$0xff]
    %v127 = vld [vmem:[%s2 + $0x50] sm:$0xff]
    %v128 = vld [vmem:[%s2 + $0x58] sm:$0xff]
    %v129 = vld [vmem:[%s2 + $0x60] sm:$0xff]
    %v130 = vld [vmem:[%s2 + $0x68] sm:$0xff]
    %v131 = vld [vmem:[%s2 + $0x70] sm:$0xff]
    %v132 = vld [vmem:[%s2 + $0x78] sm:$0xff]
    %v133 = vperm.slane %v21, 0
    %v136 = vrot.slane %v113, 7
    %v137 = vrot.slane %v114, 6
    %vm138 = vcmask 1041409
    %v139 = vsel %vm138, %v137, %v136
    %141 = vmatpush.msra.mxu0 %v132
    %142 = vmatpush.msra.mxu0 %v131
    %143 = vmatpush.msra.mxu0 %v130
    %144 = vmatpush.msra.mxu0 %v129
    %145 = vmatpush.msra.mxu0 %v128
    %146 = vmatpush.msra.mxu0 %v127
    %147 = vmatpush.msra.mxu0 %v126
    %148 = vmatpush.msra.mxu0 %v125
    %149 = vmatpush.msra.mxu0 %v124
    %150 = vmatpush.msra.mxu0 %v123
    %151 = vmatpush.msra.mxu0 %v122
    %152 = vmatpush.msra.mxu0 %v121
    %153 = vmatpush.msra.mxu0 %v120
    %154 = vmatpush.msra.mxu0 %v119
    %155 = vmatpush.msra.mxu0 %v118
    %156 = vmatpush.msra.mxu0 %v117
    %157 = vmatmul.f32.gmra.mxu0 %v139
    %v158 = vpop.f32.mrf.mxu0
    %v159 = vadd.f32 %v133, %v158
    %160 = vdwg.mxu0
    %v161 = vmax.f32 %v159, 0.0
    %162 = vst [vmem:[#allocation4] sm:$0x3] %v161
    // Predicated region
    $region14: #{scp_forward.1} parent=1 // pred_check
      _
    $region15: #{scp_forward.1} parent=1 // pred_check_branch
      %164 = sbr.rel (0) target = $region17
    $region16: #{scp_forward.1} parent=1 // pred_region
      %166 = vsyncadd [#allocation3], 0
      %s167 = sshll.u32 [#allocation2], 4
      %s168 = int_to_ptr.vmem [resolvable:$true] %s167
      %s169 = sshll.u32 %s3, 4
      %s170 = int_to_ptr.hbm [resolvable:$true] %s169
      %175 = dma.vmem_to_hbm [thread:$0]  %s168, 256, %s170, [#allocation3], 128, 128, 8
    $region17: #{scp_forward.1} parent=1 // pred_fallthru
      _
    // Predicated region
    $region18: #{scp_forward.1} parent=1 // pred_check
      _
    $region19: #{scp_forward.1} parent=1 // pred_check_branch
      %177 = sbr.rel (0) target = $region21
    $region20: #{scp_forward.1} parent=1 // pred_region
      %179 = vsyncadd [#allocation5], 0
      %s181 = sshll.u32 [#allocation4], 4
      %s182 = int_to_ptr.vmem [resolvable:$true] %s181
      %s183 = sshll.u32 %s4, 4
      %s184 = int_to_ptr.hbm [resolvable:$true] %s183
      %186 = dma.vmem_to_hbm [thread:$0]  %s182, 32, %s184, [#allocation5]
    $region21: #{scp_forward.1} parent=1 // pred_fallthru
      _
    // Predicated region
    $region22: #{scp_forward.1} parent=1 // pred_check
      _
    $region23: #{scp_forward.1} parent=1 // pred_check_branch
      %188 = sbr.rel (0) target = $region25
    $region24: #{scp_forward.1} parent=1 // pred_region
      %190 = dma.done [#allocation3], 256
    $region25: #{scp_forward.1} parent=1 // pred_fallthru
      _
    // Predicated region
    $region26: #{scp_forward.1} parent=1 // pred_check
      _
    $region27: #{scp_forward.1} parent=1 // pred_check_branch
      %192 = sbr.rel (0) target = $region29
    $region28: #{scp_forward.1} parent=1 // pred_region
      %194 = dma.done [#allocation5], 32
    $region29: #{scp_forward.1} parent=1 // pred_fallthru
      _
    %195 = vsyncpa [#allocation3], 1
    %196 = vsyncpa [#allocation5], 1

</llo_original>
